<compile_context>
chip_gen: v7x
topology: tpu7x:2x2x1
jax: 0.10.0
libtpu: 0.0.40
codegen_flags: <defaults>
</compile_context>

<pallas_src>
import functools

import jax
import jax.numpy as jnp
from jax.experimental import pallas as pl
from jax.experimental.pallas import tpu as pltpu


def _cdiv(a, b):
    return (a + b - 1) // b


def _round_up(v, m):
    return ((v + m - 1) // m) * m


def _vmem_budget_bytes():
    """Usable VMEM budget per TensorCore (leaves headroom for Mosaic scratch)."""
    try:
        cap = int(pltpu.get_tpu_info().vmem_capacity_bytes)
    except Exception:
        cap = 64 << 20                      # conservative fallback (v7x per-TC)
    return max(min(int(cap * 0.80), cap - (8 << 20)), 16 << 20)


def _fused_ln_gate_linear_kernel(x_ref, g_ref, nw_ref, lw_ref, lb_ref, o_ref,
                                 y_ref, *, eps):
    # Grid: (row blocks [parallel], output-column blocks [arbitrary, innermost]).
    # LN + swish gate for this row block is computed once (j == 0) and cached in
    # the VMEM scratch `y_ref` (matmul dtype); tiles j > 0 reuse it and only run
    # the MXU matmul against their weight tile.
    @pl.when(pl.program_id(1) == 0)
    def _():
        x = x_ref[...].astype(jnp.float32)
        g = g_ref[...].astype(jnp.float32)

        # LayerNorm (not RMS), biased variance, f32 statistics.
        mean = jnp.mean(x, axis=-1, keepdims=True)
        xbar = x - mean
        var = jnp.mean(xbar * xbar, axis=-1, keepdims=True)
        xhat = xbar * jax.lax.rsqrt(var + eps)

        # Elementwise affine (norm bias is None in the module) + swish gate.
        y = xhat * nw_ref[...].astype(jnp.float32)
        y = y * g * jax.nn.sigmoid(g)            # sigmoid -> EUP slot
        y_ref[...] = y.astype(y_ref.dtype)

    # Fused linear projection on the MXU for this (N, block_cols) weight tile.
    out = jnp.dot(y_ref[...], lw_ref[...], preferred_element_type=jnp.float32)
    out = out + lb_ref[...].astype(jnp.float32)
    o_ref[...] = out.astype(o_ref.dtype)


def fused_layer_norm_gated_linear(x, g, norm_weight, linear_weight,
                                  linear_bias=None,
                                  eps: float = 1e-5,
                                  block_rows: int = 256,
                                  max_block_cols: int = 1024,
                                  matmul_dtype=jnp.bfloat16,
                                  linear_weight_layout: str = "OI",
                                  allow_resident_weight: bool = True):
    """x, g: [..., N]; norm_weight: (N,);
    linear_weight: (O, N) if layout=="OI" (PyTorch convention) or (N, O) if "IO"
    (pre-transposed, preferred for repeated calls); linear_bias: (O,) or None.
    matmul_dtype: dtype of MXU operands (bf16 default, f32 accumulation).
    Returns [..., O] in x.dtype."""
    orig_shape = x.shape
    N = x.shape[-1]
    x_dtype = x.dtype

    # --- weight prep.  Ideally hoisted out of the hot path by the caller:
    # store the parameter pre-transposed ("IO"), in matmul_dtype, O padded to 128.
    # TODO(synk): expose a prepare_weights() helper so training loops pay this once.
    if linear_weight_layout == "OI":
        lw = jnp.transpose(linear_weight)            # (N, O)
    else:
        lw = linear_weight                           # already (N, O)
    O = lw.shape[1]

    if matmul_dtype is None:
        matmul_dtype = x_dtype
    matmul_dtype = jnp.dtype(matmul_dtype)
    if lw.dtype != matmul_dtype:
        lw = lw.astype(matmul_dtype)

    x2 = x.reshape(-1, N)
    g2 = g.reshape(-1, N)
    M = x2.shape[0]

    x_is = jnp.dtype(x_dtype).itemsize
    w_is = matmul_dtype.itemsize
    out_is = x_is

    budget = _vmem_budget_bytes()

    def vmem_estimate(br, bc):
        b = 2 * 2 * br * N * x_is               # x, g tiles (double-buffered)
        b += 2 * N * bc * w_is                  # weight tile (double-buffered)
        b += 2 * 8 * bc * w_is                  # bias tile (sublane-padded)
        b += 2 * 8 * N * x_is                   # norm-weight tile
        b += 2 * br * bc * out_is               # output tile (double-buffered)
        b += br * N * w_is                      # cached gated activation scratch
        b += 6 * br * N * 4                     # f32 elementwise temporaries
        return b

    # --- row tiling: balanced blocks, pad only up to one alignment unit ---
    row_align = 16                               # safe sublane count for f32 and bf16
    M_a = _round_up(M, row_align)
    n_row = _cdiv(M_a, max(block_rows, row_align))
    br = _round_up(_cdiv(M_a, n_row), row_align)

    # --- output-feature tiling ---
    O128 = _round_up(O, 128)
    if allow_resident_weight and vmem_estimate(br, O128) <= budget:
        # Whole (padded) weight resident in VMEM: read from HBM exactly once.
        bc = O128
    else:
        # Lane-dense streamed tile: largest multiple of 128 <= max_block_cols
        # that divides O128 (no over-padding of the output features).
        units = O128 // 128
        max_units = max(1, min(max_block_cols, O128) // 128)
        bc = 128 * max(u for u in range(1, max_units + 1) if units % u == 0)
        # Weight is re-streamed once per row block; raise arithmetic intensity
        # with bigger row blocks on large-VMEM parts (v5e / v6e).
        for target in (512, 384):
            if target > br and M_a > br:
                n2 = _cdiv(M_a, target)
                br2 = _round_up(_cdiv(M_a, n2), row_align)
                if br2 > br and vmem_estimate(br2, bc) <= budget:
                    br = br2
                    break
        # Very large N: shrink the row block until it fits the budget.
        while vmem_estimate(br, bc) > budget and br > row_align:
            br = _round_up(br // 2, row_align)

    n_row = _cdiv(M_a, br)
    M_pad = n_row * br
    O_pad = O128
    grid = (n_row, O_pad // bc)

    # --- host-side padding: only boundary slivers (zero rows normalize to
    #     finite values and are sliced off) ---
    if M_pad != M:
        x2 = jnp.pad(x2, ((0, M_pad - M), (0, 0)))
        g2 = jnp.pad(g2, ((0, M_pad - M), (0, 0)))
    if O_pad != O:
        lw = jnp.pad(lw, ((0, 0), (0, O_pad - O)))
    if linear_bias is None:
        lb = jnp.zeros((1, O_pad), dtype=x_dtype)
    else:
        lb = linear_bias.astype(x_dtype)
        if O_pad != O:
            lb = jnp.pad(lb, (0, O_pad - O))
        lb = lb.reshape(1, O_pad)
    nw = norm_weight.reshape(1, N)

    kernel = functools.partial(_fused_ln_gate_linear_kernel, eps=eps)

    # Honest traffic estimate: weight is re-read once per row block when column
    # tiled (j inner), exactly once when resident (single j tile).
    weight_reads = 1 if grid[1] == 1 else grid[0]
    cost = pl.CostEstimate(
        flops=int(2 * M_pad * N * O_pad),
        transcendentals=int(M_pad * N),                 # sigmoid
        bytes_accessed=int((x2.size + g2.size) * x_is
                           + weight_reads * lw.size * w_is
                           + lb.size * lb.dtype.itemsize
                           + nw.size * nw.dtype.itemsize
                           + M_pad * O_pad * out_is),
    )

    out2 = pl.pallas_call(
        kernel,
        out_shape=jax.ShapeDtypeStruct((M_pad, O_pad), x_dtype),
        grid_spec=pltpu.PrefetchScalarGridSpec(
            num_scalar_prefetch=0,
            grid=grid,
            in_specs=[
                pl.BlockSpec((br, N), lambda i, j: (i, 0)),    # x rows (fetched once per i)
                pl.BlockSpec((br, N), lambda i, j: (i, 0)),    # g rows
                pl.BlockSpec((1, N), lambda i, j: (0, 0)),     # norm weight
                pl.BlockSpec((N, bc), lambda i, j: (0, j)),    # linear weight tile
                pl.BlockSpec((1, bc), lambda i, j: (0, j)),    # bias tile
            ],
            out_specs=pl.BlockSpec((br, bc), lambda i, j: (i, j)),
            scratch_shapes=[pltpu.VMEM((br, N), matmul_dtype)],  # cached y
        ),
        compiler_params=pltpu.CompilerParams(
            dimension_semantics=("parallel", "arbitrary"),
            vmem_limit_bytes=int(budget)),
        cost_estimate=cost,
    )(x2, g2, nw, lw, lb)

    out2 = out2[:M, :O]
    return out2.reshape(orig_shape[:-1] + (O,))


def _reference(x, g, norm_weight, linear_weight, linear_bias, eps=1e-5):
    xf = x.astype(jnp.float32)
    gf = g.astype(jnp.float32)
    mean = jnp.mean(xf, axis=-1, keepdims=True)
    var = jnp.mean((xf - mean) ** 2, axis=-1, keepdims=True)
    xhat = (xf - mean) * jax.lax.rsqrt(var + eps)
    y = xhat * norm_weight
    y = y * gf * jax.nn.sigmoid(gf)
    out = y @ linear_weight.T
    if linear_bias is not None:
        out = out + linear_bias
    return out.astype(x.dtype)


if __name__ == "__main__":
    key = jax.random.PRNGKey(0)
    batch, seq, hidden, out_features = 2, 8, 32, 64
    eps = 1e-5

    k1, k2, k3, k4 = jax.random.split(key, 4)
    x = jax.random.normal(k1, (batch, seq, hidden), dtype=jnp.float32)
    g = jax.random.normal(k2, (batch, seq, hidden), dtype=jnp.float32)

    # Module parameters: norm weight initialized to ones (reset_parameters),
    # norm bias is None. Linear weight/bias are forward-time args of the module.
    norm_weight = jnp.ones((hidden,), dtype=jnp.float32)
    linear_weight = jax.random.normal(k3, (out_features, hidden), dtype=jnp.float32) * 0.1
    linear_bias = jax.random.normal(k4, (out_features,), dtype=jnp.float32) * 0.1

    ref = _reference(x, g, norm_weight, linear_weight, linear_bias, eps=eps)

    # Exact-precision path (f32 MXU operands) -> tight tolerance.
    out_f32 = fused_layer_norm_gated_linear(
        x, g, norm_weight, linear_weight, linear_bias, eps=eps,
        matmul_dtype=jnp.float32)
    out_f32 = jax.block_until_ready(out_f32)
    assert out_f32.shape == (batch, seq, out_features)
    assert jnp.allclose(out_f32, ref, atol=1e-4, rtol=1e-4), "f32 path mismatch"

    # Default fast path (bf16 MXU operands, f32 accumulation) -> looser tolerance.
    out_bf16 = fused_layer_norm_gated_linear(
        x, g, norm_weight, linear_weight, linear_bias, eps=eps)
    out_bf16 = jax.block_until_ready(out_bf16)
    assert out_bf16.shape == (batch, seq, out_features)
    assert jnp.allclose(out_bf16, ref, atol=3e-2, rtol=3e-2), "bf16 path mismatch"

    # Odd shapes: exercise row padding (M=15) and output-feature padding (O=100).
    xo = jax.random.normal(k1, (3, 5, hidden), dtype=jnp.float32)
    go = jax.random.normal(k2, (3, 5, hidden), dtype=jnp.float32)
    wo = jax.random.normal(k3, (100, hidden), dtype=jnp.float32) * 0.1
    bo = jax.random.normal(k4, (100,), dtype=jnp.float32) * 0.1
    out_o = fused_layer_norm_gated_linear(xo, go, norm_weight, wo, bo, eps=eps,
                                          matmul_dtype=jnp.float32)
    out_o = jax.block_until_ready(out_o)
    refo = _reference(xo, go, norm_weight, wo, bo, eps=eps)
    assert out_o.shape == (3, 5, 100)
    assert jnp.allclose(out_o, refo, atol=1e-4, rtol=1e-4), "odd-shape mismatch"

    # Multi-column-tile path: forces grid_j > 1 so the cached-y ("arbitrary" j
    # axis) reuse is exercised.
    ws = jax.random.normal(k3, (256, hidden), dtype=jnp.float32) * 0.1
    bs = jax.random.normal(k4, (256,), dtype=jnp.float32) * 0.1
    out_s = fused_layer_norm_gated_linear(xo, go, norm_weight, ws, bs, eps=eps,
                                          matmul_dtype=jnp.float32,
                                          max_block_cols=128,
                                          allow_resident_weight=False)
    out_s = jax.block_until_ready(out_s)
    refs = _reference(xo, go, norm_weight, ws, bs, eps=eps)
    assert out_s.shape == (3, 5, 256)
    assert jnp.allclose(out_s, refs, atol=1e-4, rtol=1e-4), "streamed-weight mismatch"

    print("KERNEL_OK")
</pallas_src>

<mosaic_0001>
module attributes {stable_mosaic.version = 11 : i64} {
  func.func @_fused_ln_gate_linear_kernel(%arg0: i32, %arg1: i32, %arg2: memref<16x32xf32, #tpu.memory_space<vmem>>, %arg3: memref<16x32xf32, #tpu.memory_space<vmem>>, %arg4: memref<1x32xf32, #tpu.memory_space<vmem>>, %arg5: memref<32x128xf32, #tpu.memory_space<vmem>>, %arg6: memref<1x128xf32, #tpu.memory_space<vmem>>, %arg7: memref<16x128xf32, #tpu.memory_space<vmem>>, %arg8: memref<16x32xf32, #tpu.memory_space<vmem>>) attributes {dimension_semantics = [#tpu.dimension_semantics<parallel>, #tpu.dimension_semantics<arbitrary>], iteration_bounds = array<i64: 1, 1>, scalar_prefetch = 0 : i64, scratch_operands = 1 : i64, tpu.core_type = #tpu.core_type<tc>, window_params = [{transform_indices = @transform_0, window_bounds = array<i64: 16, 32>}, {transform_indices = @transform_1, window_bounds = array<i64: 16, 32>}, {pipeline_mode = #tpu.pipeline_mode<synchronous>, transform_indices = @transform_2, window_bounds = array<i64: 1, 32>}, {transform_indices = @transform_3, window_bounds = array<i64: 32, 128>}, {transform_indices = @transform_4, window_bounds = array<i64: 1, 128>}, {transform_indices = @transform_5, window_bounds = array<i64: 16, 128>}]} {
    %c0_i32 = arith.constant 0 : i32
    %0 = arith.cmpi eq, %arg1, %c0_i32 : i32
    %1 = arith.extui %0 : i1 to i32
    %c0_i32_0 = arith.constant 0 : i32
    %2 = arith.cmpi ne, %1, %c0_i32_0 : i32
    scf.if %2 {
      %c0_8 = arith.constant 0 : index
      %c0_9 = arith.constant 0 : index
      %10 = vector.load %arg2[%c0_8, %c0_9] : memref<16x32xf32, #tpu.memory_space<vmem>>, vector<16x32xf32>
      %c0_10 = arith.constant 0 : index
      %c0_11 = arith.constant 0 : index
      %11 = vector.load %arg3[%c0_10, %c0_11] : memref<16x32xf32, #tpu.memory_space<vmem>>, vector<16x32xf32>
      %cst_12 = arith.constant dense<0.000000e+00> : vector<16xf32>
      %12 = vector.multi_reduction <add>, %10, %cst_12 [1] : vector<16x32xf32> to vector<16xf32>
      %13 = vector.shape_cast %12 : vector<16xf32> to vector<16x1xf32>
      %cst_13 = arith.constant 3.200000e+01 : f32
      %14 = vector.broadcast %cst_13 : f32 to vector<16x1xf32>
      %15 = arith.divf %13, %14 : vector<16x1xf32>
      %16 = vector.broadcast %15 : vector<16x1xf32> to vector<16x32xf32>
      %17 = arith.subf %10, %16 : vector<16x32xf32>
      %18 = arith.mulf %17, %17 : vector<16x32xf32>
      %cst_14 = arith.constant dense<0.000000e+00> : vector<16xf32>
      %19 = vector.multi_reduction <add>, %18, %cst_14 [1] : vector<16x32xf32> to vector<16xf32>
      %20 = vector.shape_cast %19 : vector<16xf32> to vector<16x1xf32>
      %cst_15 = arith.constant 3.200000e+01 : f32
      %21 = vector.broadcast %cst_15 : f32 to vector<16x1xf32>
      %22 = arith.divf %20, %21 : vector<16x1xf32>
      %cst_16 = arith.constant 9.99999974E-6 : f32
      %23 = vector.broadcast %cst_16 : f32 to vector<16x1xf32>
      %24 = arith.addf %22, %23 : vector<16x1xf32>
      %25 = math.rsqrt %24 : vector<16x1xf32>
      %26 = vector.broadcast %25 : vector<16x1xf32> to vector<16x32xf32>
      %27 = arith.mulf %17, %26 : vector<16x32xf32>
      %c0_17 = arith.constant 0 : index
      %c0_18 = arith.constant 0 : index
      %28 = vector.load %arg4[%c0_17, %c0_18] : memref<1x32xf32, #tpu.memory_space<vmem>>, vector<1x32xf32>
      %29 = vector.broadcast %28 : vector<1x32xf32> to vector<16x32xf32>
      %30 = arith.mulf %27, %29 : vector<16x32xf32>
      %31 = arith.mulf %30, %11 : vector<16x32xf32>
      %32 = arith.negf %11 : vector<16x32xf32>
      %33 = math.exp %32 : vector<16x32xf32>
      %cst_19 = arith.constant 1.000000e+00 : f32
      %34 = vector.broadcast %cst_19 : f32 to vector<16x32xf32>
      %35 = arith.addf %34, %33 : vector<16x32xf32>
      %36 = arith.divf %34, %35 : vector<16x32xf32>
      %37 = arith.mulf %31, %36 : vector<16x32xf32>
      %c0_20 = arith.constant 0 : index
      %c0_21 = arith.constant 0 : index
      %38 = vector.load %arg8[%c0_20, %c0_21] : memref<16x32xf32, #tpu.memory_space<vmem>>, vector<16x32xf32>
      tpu.vector_store %arg8[%c0_20, %c0_21], %37 {strides = array<i32>} : memref<16x32xf32, #tpu.memory_space<vmem>>, vector<16x32xf32>,
    } else {
    }
    %c0 = arith.constant 0 : index
    %c0_1 = arith.constant 0 : index
    %3 = vector.load %arg8[%c0, %c0_1] : memref<16x32xf32, #tpu.memory_space<vmem>>, vector<16x32xf32>
    %c0_2 = arith.constant 0 : index
    %c0_3 = arith.constant 0 : index
    %4 = vector.load %arg5[%c0_2, %c0_3] : memref<32x128xf32, #tpu.memory_space<vmem>>, vector<32x128xf32>
    %cst = arith.constant dense<0.000000e+00> : vector<16x128xf32>
    %5 = tpu.matmul %3, %4, %cst {dimension_numbers = #tpu.dot_dimension_numbers<[1], [0], [0], [1], [0, 0, 1, 1], [], []>} : vector<16x32xf32>, vector<32x128xf32>, vector<16x128xf32> -> vector<16x128xf32>
    %c0_4 = arith.constant 0 : index
    %c0_5 = arith.constant 0 : index
    %6 = vector.load %arg6[%c0_4, %c0_5] : memref<1x128xf32, #tpu.memory_space<vmem>>, vector<1x128xf32>
    %7 = vector.broadcast %6 : vector<1x128xf32> to vector<16x128xf32>
    %8 = arith.addf %5, %7 : vector<16x128xf32>
    %c0_6 = arith.constant 0 : index
    %c0_7 = arith.constant 0 : index
    %9 = vector.load %arg7[%c0_6, %c0_7] : memref<16x128xf32, #tpu.memory_space<vmem>>, vector<16x128xf32>
    tpu.vector_store %arg7[%c0_6, %c0_7], %8 {strides = array<i32>} : memref<16x128xf32, #tpu.memory_space<vmem>>, vector<16x128xf32>,
    return
  }
  func.func @transform_0(%arg0: i32, %arg1: i32) -> (i32, i32) {
    %c0_i32 = arith.constant 0 : i32
    %c0_i32_0 = arith.constant 0 : i32
    return %arg0, %c0_i32 : i32, i32
  }
  func.func @transform_1(%arg0: i32, %arg1: i32) -> (i32, i32) {
    %c0_i32 = arith.constant 0 : i32
    %c0_i32_0 = arith.constant 0 : i32
    return %arg0, %c0_i32 : i32, i32
  }
  func.func @transform_2(%arg0: i32, %arg1: i32) -> (i32, i32) {
    %c0_i32 = arith.constant 0 : i32
    %c0_i32_0 = arith.constant 0 : i32
    %c0_i32_1 = arith.constant 0 : i32
    return %c0_i32, %c0_i32_0 : i32, i32
  }
  func.func @transform_3(%arg0: i32, %arg1: i32) -> (i32, i32) {
    %c0_i32 = arith.constant 0 : i32
    %c0_i32_0 = arith.constant 0 : i32
    return %c0_i32, %arg1 : i32, i32
  }
  func.func @transform_4(%arg0: i32, %arg1: i32) -> (i32, i32) {
    %c0_i32 = arith.constant 0 : i32
    %c0_i32_0 = arith.constant 0 : i32
    return %c0_i32, %arg1 : i32, i32
  }
  func.func @transform_5(%arg0: i32, %arg1: i32) -> (i32, i32) {
    %c0_i32 = arith.constant 0 : i32
    return %arg0, %arg1 : i32, i32
  }
}

</mosaic_0001>

<llo_original>
// kernel: tpu_custom_call.1
$region0: #{tpu_custom_call.1}
  #allocation0 [shape = 'u32[]', space=smem, size = 0x4, offset = 0x4, fixed_abs, tag = 'smem constant byte address 0x4 - core index']
  #allocation1 [shape = 'u32[144,128]{1,0:T(1,128)}', space=vmem, size = 0x12000, scoped, tag = 'internal scratch']
  #allocation2 [shape = 'f32[16,32]{1,0:T(8,128)}', space=vmem, size = 0x2000, scoped, tag = 'scratch operand']
  %s0 = inlined_call_operand.hbm [shape: f32[16,32], index: 0, kind: input, shape index: {}]
  %s1 = inlined_call_operand.hbm [shape: f32[16,32], index: 1, kind: input, shape index: {}]
  %s2 = inlined_call_operand.vmem [shape: f32[1,32], index: 2, kind: input, shape index: {}]
  %s3 = inlined_call_operand.hbm [shape: f32[32,128], index: 3, kind: input, shape index: {}]
  %s4 = inlined_call_operand.vmem [shape: f32[1,128], index: 4, kind: input, shape index: {}]
  %s5 = inlined_call_operand.hbm [shape: f32[16,128], index: 5, kind: output, shape index: {}]
  %s6 = sld [smem:[#allocation0]]
  $region46: #{tpu_custom_call.1} parent=0
    _
  %s8 = ssub.s32 1, %s6
  %s9 = scalar_select 0, %s8, %s6
  $region1: #{tpu_custom_call.1} parent=0
    #allocation3 [shape = 'u8[8192]{0}', space=vmem, size = 0x2000, scoped, tag = 'input window, operand 0, single buffered']
    #allocation4 [shape = 's32[1]{0}', space=sflag, size = 0x4, scoped, tag = 'scoped memory for tpu_custom_call.1']
    #allocation5 [shape = 's32[1]{0}', space=sflag, size = 0x4, scoped, tag = 'scoped memory for tpu_custom_call.1']
    #allocation6 [shape = 'u8[8192]{0}', space=vmem, size = 0x2000, scoped, tag = 'input window, operand 1, single buffered']
    #allocation7 [shape = 's32[1]{0}', space=sflag, size = 0x4, scoped, tag = 'scoped memory for tpu_custom_call.1']
    #allocation8 [shape = 'u8[16384]{0}', space=vmem, size = 0x4000, scoped, tag = 'input window, operand 3, single buffered']
    #allocation9 [shape = 'u8[8192]{0}', space=vmem, size = 0x2000, scoped, tag = 'output window, operand 0, single buffered']
    %10 = vsyncpa [#allocation4], 0
    %11 = vsyncpa [#allocation7], 0
    %12 = vsyncpa [#allocation5], 0
    // Predicated region
    $region2: #{tpu_custom_call.1} parent=1 // pred_check
      _
    $region3: #{tpu_custom_call.1} parent=1 // pred_check_branch
      %14 = sbr.rel (0) target = $region5
    $region4: #{tpu_custom_call.1} parent=1 // pred_region
      %s16 = ssub.s32 256, 256
      %17 = vsyncadd [#allocation4], %s16
      %s18 = sshll.u32 [#allocation3], 4
      %s19 = int_to_ptr.vmem [resolvable:$true] %s18
      %24 = dma.hbm_to_vmem [thread:$0]  %s0, 256, %s19, [#allocation4], 128, 128, 8
    $region5: #{tpu_custom_call.1} parent=1 // pred_fallthru
      _
    // Predicated region
    $region6: #{tpu_custom_call.1} parent=1 // pred_check
      _
    $region7: #{tpu_custom_call.1} parent=1 // pred_check_branch
      %26 = sbr.rel (0) target = $region9
    $region8: #{tpu_custom_call.1} parent=1 // pred_region
      %s28 = ssub.s32 256, 256
      %29 = vsyncadd [#allocation7], %s28
      %s30 = sshll.u32 [#allocation6], 4
      %s31 = int_to_ptr.vmem [resolvable:$true] %s30
      %36 = dma.hbm_to_vmem [thread:$0]  %s1, 256, %s31, [#allocation7], 128, 128, 8
    $region9: #{tpu_custom_call.1} parent=1 // pred_fallthru
      _
    // Predicated region
    $region10: #{tpu_custom_call.1} parent=1 // pred_check
      _
    $region11: #{tpu_custom_call.1} parent=1 // pred_check_branch
      %38 = sbr.rel (0) target = $region13
    $region12: #{tpu_custom_call.1} parent=1 // pred_region
      _
    $region13: #{tpu_custom_call.1} parent=1 // pred_fallthru
      _
    // Predicated region
    $region14: #{tpu_custom_call.1} parent=1 // pred_check
      _
    $region15: #{tpu_custom_call.1} parent=1 // pred_check_branch
      %40 = sbr.rel (0) target = $region17
    $region16: #{tpu_custom_call.1} parent=1 // pred_region
      %s42 = ssub.s32 512, 512
      %43 = vsyncadd [#allocation7], %s42
      %s44 = sshll.u32 [#allocation8], 4
      %s45 = int_to_ptr.vmem [resolvable:$true] %s44
      %50 = dma.hbm_to_vmem [thread:$0]  %s3, 512, %s45, [#allocation7], 128, 128, 8
    $region17: #{tpu_custom_call.1} parent=1 // pred_fallthru
      _
    // Predicated region
    $region18: #{tpu_custom_call.1} parent=1 // pred_check
      _
    $region19: #{tpu_custom_call.1} parent=1 // pred_check_branch
      %52 = sbr.rel (0) target = $region21
    $region20: #{tpu_custom_call.1} parent=1 // pred_region
      _
    $region21: #{tpu_custom_call.1} parent=1 // pred_fallthru
      _
    // Predicated region
    $region22: #{tpu_custom_call.1} parent=1 // pred_check
      _
    $region23: #{tpu_custom_call.1} parent=1 // pred_check_branch
      %54 = sbr.rel (0) target = $region25
    $region24: #{tpu_custom_call.1} parent=1 // pred_region
      %55 = dma.done [#allocation4], 256
    $region25: #{tpu_custom_call.1} parent=1 // pred_fallthru
      _
    // Predicated region
    $region26: #{tpu_custom_call.1} parent=1 // pred_check
      _
    $region27: #{tpu_custom_call.1} parent=1 // pred_check_branch
      %57 = sbr.rel (0) target = $region29
    $region28: #{tpu_custom_call.1} parent=1 // pred_region
      %58 = dma.done [#allocation7], 256
    $region29: #{tpu_custom_call.1} parent=1 // pred_fallthru
      _
    // Predicated region
    $region30: #{tpu_custom_call.1} parent=1 // pred_check
      _
    $region31: #{tpu_custom_call.1} parent=1 // pred_check_branch
      %60 = sbr.rel (0) target = $region33
    $region32: #{tpu_custom_call.1} parent=1 // pred_region
      %61 = dma.done [#allocation7], 512
    $region33: #{tpu_custom_call.1} parent=1 // pred_fallthru
      _
    %p62 = scmp.eq.s32.totalorder 0, 0
    // Predicated region
    $region34: #{tpu_custom_call.1} parent=1 // pred_check
      %p63 = pneg %p62
    $region35: #{tpu_custom_call.1} parent=1 // pred_check_branch
      %65 = sbr.rel (%p63) target = $region37
    $region36: #{tpu_custom_call.1} parent=1 // pred_region
      %v66 = vld [vmem:[#allocation3] sm:$0xff]
      %v67 = vld [vmem:[#allocation3 + $0x8] sm:$0xff]
      %v68 = vld [vmem:[#allocation6] sm:$0xff]
      %v69 = vld [vmem:[#allocation6 + $0x8] sm:$0xff]
      %vm70 = vcmask 261120
      %v71 = vsel %vm70, %v66, 0.0
      %72 = vadd.xlane.f32.xlu0 %v71
      %v73 = vpop.xlane.xlu0 %72
      %v74 = vsel %vm70, %v67, 0.0
      %75 = vadd.xlane.f32.xlu0 %v74
      %v76 = vpop.xlane.xlu0 %75
      %v77 = vrcp.pop 32.0
      %v78 = vmul.f32 %v73, %v77
      %v79 = vmul.f32 %v76, %v77
      %v80 = vsub.f32 %v66, %v78
      %v81 = vsub.f32 %v67, %v79
      %v82 = vmul.f32 %v80, %v80
      %v83 = vmul.f32 %v81, %v81
      %v84 = vsel %vm70, %v82, 0.0
      %85 = vadd.xlane.f32.xlu0 %v84
      %v86 = vpop.xlane.xlu0 %85
      %v87 = vsel %vm70, %v83, 0.0
      %88 = vadd.xlane.f32.xlu0 %v87
      %v89 = vpop.xlane.xlu0 %88
      %v90 = vmul.f32 %v86, %v77
      %v91 = vmul.f32 %v89, %v77
      %v92 = vadd.f32 %v90, 1e-05
      %v93 = vadd.f32 %v91, 1e-05
      %v94 = vrsqrt.pop %v92
      %v95 = vrsqrt.pop %v93
      %v96 = vmul.f32 %v80, %v94
      %v97 = vmul.f32 %v81, %v95
      %v98 = vld [vmem:[%s2] sm:$0x1]
      %v100 = vlaneseq
      %v101 = vshrl.u32 %v100, 7
      %v102 = vsub.s32 0, %v101
      %v103 = vrot.slane %v98, %v102
      %v105 = vmul.f32 %v96, %v103
      %v106 = vmul.f32 %v97, %v103
      %v107 = vmul.f32 %v105, %v68
      %v108 = vmul.f32 %v106, %v69
      %v109 = vxor.u32 %v68, 2147483648
      %v110 = vxor.u32 %v69, 2147483648
      %v111 = vmul.f32 %v109, 1.442695
      %v112 = vpow.pop %v111
      %v113 = vmul.f32 %v110, 1.442695
      %v114 = vpow.pop %v113
      %v115 = vadd.f32 %v112, 1.0
      %v116 = vadd.f32 %v114, 1.0
      %v117 = vrcp.pop %v115
      %v118 = vmul.f32 1.0, %v117
      %v119 = vrcp.pop %v116
      %v120 = vmul.f32 1.0, %v119
      %v121 = vmul.f32 %v107, %v118
      %v122 = vmul.f32 %v108, %v120
      %123 = vst.msk [vmem:[#allocation2] sm:$0xff] %vm70, %v121
      %124 = vst.msk [vmem:[#allocation2 + $0x8] sm:$0xff] %vm70, %v122
    $region37: #{tpu_custom_call.1} parent=1 // pred_fallthru
      _
    %v125 = vld [vmem:[#allocation2] sm:$0xff]
    %v126 = vld [vmem:[#allocation2 + $0x8] sm:$0xff]
    %v127 = vld [vmem:[#allocation8] sm:$0xff]
    %v128 = vld [vmem:[#allocation8 + $0x8] sm:$0xff]
    %v129 = vld [vmem:[#allocation8 + $0x10] sm:$0xff]
    %v130 = vld [vmem:[#allocation8 + $0x18] sm:$0xff]
    %v131 = vld [vmem:[%s4] sm:$0x1]
    %v133 = vlaneseq
    %v134 = vshrl.u32 %v133, 7
    %v135 = vsub.s32 0, %v134
    %v136 = vrot.slane %v131, %v135
    %vm138 = vcmask 261120
    %v140 = vsel %vm138, %v125, 0
    %v143 = vsel %vm138, %v126, 0
    %145 = vmatprep.subr.mxu0 0.0
    %146 = vmatpush1.msra.mxu0 %v127
    %147 = vmatprep.subr.mxu0 0.0
    %148 = vmatpush1.msra.mxu0 %v128
    %149 = vmatprep.subr.mxu0 0.0
    %150 = vmatpush1.msra.mxu0 %v129
    %151 = vmatprep.subr.mxu0 0.0
    %152 = vmatpush1.msra.mxu0 %v130
    %153 = vmatprep.subr.mxu0 0.0
    %154 = vmatpush1.msra.mxu0 0.0
    %155 = vmatprep.subr.mxu0 0.0
    %156 = vmatpush1.msra.mxu0 0.0
    %157 = vmatprep.subr.mxu0 0.0
    %158 = vmatpush1.msra.mxu0 0.0
    %159 = vmatprep.subr.mxu0 0.0
    %160 = vmatpush1.msra.mxu0 0.0
    %161 = vmatprep.subr.mxu0 0.0
    %162 = vmatpush1.msra.mxu0 0.0
    %163 = vmatprep.subr.mxu0 0.0
    %164 = vmatpush1.msra.mxu0 0.0
    %165 = vmatprep.subr.mxu0 0.0
    %166 = vmatpush1.msra.mxu0 0.0
    %167 = vmatprep.subr.mxu0 0.0
    %168 = vmatpush1.msra.mxu0 0.0
    %169 = vmatprep.subr.mxu0 0.0
    %170 = vmatpush1.msra.mxu0 0.0
    %171 = vmatprep.subr.mxu0 0.0
    %172 = vmatpush1.msra.mxu0 0.0
    %173 = vmatprep.subr.mxu0 0.0
    %174 = vmatpush1.msra.mxu0 0.0
    %175 = vmatprep.subr.mxu0 0.0
    %176 = vmatpush1.msra.mxu0 0.0
    %177 = vmatprep.subr.mxu0 0.0
    %178 = vmatpush1.msra.mxu0 0.0
    %179 = vmatprep.subr.mxu0 0.0
    %180 = vmatpush1.msra.mxu0 0.0
    %181 = vmatprep.subr.mxu0 0.0
    %182 = vmatpush1.msra.mxu0 0.0
    %183 = vmatprep.subr.mxu0 0.0
    %184 = vmatpush1.msra.mxu0 0.0
    %185 = vmatprep.subr.mxu0 0.0
    %186 = vmatpush1.msra.mxu0 0.0
    %187 = vmatprep.subr.mxu0 0.0
    %188 = vmatpush1.msra.mxu0 0.0
    %189 = vmatprep.subr.mxu0 0.0
    %190 = vmatpush1.msra.mxu0 0.0
    %191 = vmatprep.subr.mxu0 0.0
    %192 = vmatpush1.msra.mxu0 0.0
    %193 = vmatprep.subr.mxu0 0.0
    %194 = vmatpush1.msra.mxu0 0.0
    %195 = vmatprep.subr.mxu0 0.0
    %196 = vmatpush1.msra.mxu0 0.0
    %197 = vmatprep.subr.mxu0 0.0
    %198 = vmatpush1.msra.mxu0 0.0
    %199 = vmatprep.subr.mxu0 0.0
    %200 = vmatpush1.msra.mxu0 0.0
    %201 = vmatprep.subr.mxu0 0.0
    %202 = vmatpush1.msra.mxu0 0.0
    %203 = vmatprep.subr.mxu0 0.0
    %204 = vmatpush1.msra.mxu0 0.0
    %205 = vmatprep.subr.mxu0 0.0
    %206 = vmatpush1.msra.mxu0 0.0
    %207 = vmatprep.subr.mxu0 0.0
    %208 = vmatpush1.msra.mxu0 0.0
    %209 = vmatprep.mubr.f32.mxu0 0.0
    %210 = vmatmul.mubr.f32.gmra.mrb[0].mxu0 %v140
    %v211 = vpop.f32.mrb[0].mxu0
    %v212 = vadd.f32 %v136, %v211
    %v213 = vpop.f32.mrb[0].mxu0
    %214 = vmatprep.mubr.f32.mxu0 0.0
    %215 = vmatmul.mubr.f32.gmra.mrb[0].mxu0 %v143
    %v216 = vpop.f32.mrb[0].mxu0
    %v217 = vadd.f32 %v136, %v216
    %v218 = vpop.f32.mrb[0].mxu0
    %219 = vdwg.mxu0
    %220 = vst [vmem:[#allocation9] sm:$0xff] %v212
    %221 = vst [vmem:[#allocation9 + $0x8] sm:$0xff] %v217
    // Predicated region
    $region38: #{tpu_custom_call.1} parent=1 // pred_check
      _
    $region39: #{tpu_custom_call.1} parent=1 // pred_check_branch
      %223 = sbr.rel (0) target = $region41
    $region40: #{tpu_custom_call.1} parent=1 // pred_region
      %s225 = ssub.s32 256, 256
      %226 = vsyncadd [#allocation5], %s225
      %s227 = sshll.u32 [#allocation9], 4
      %s228 = int_to_ptr.vmem [resolvable:$true] %s227
      %233 = dma.vmem_to_hbm [thread:$0]  %s228, 256, %s5, [#allocation5], 128, 128, 8
    $region41: #{tpu_custom_call.1} parent=1 // pred_fallthru
      _
    // Predicated region
    $region42: #{tpu_custom_call.1} parent=1 // pred_check
      _
    $region43: #{tpu_custom_call.1} parent=1 // pred_check_branch
      %235 = sbr.rel (0) target = $region45
    $region44: #{tpu_custom_call.1} parent=1 // pred_region
      %236 = dma.done [#allocation5], 256
    $region45: #{tpu_custom_call.1} parent=1 // pred_fallthru
      _
    %237 = vsyncpa [#allocation4], 1
    %238 = vsyncpa [#allocation7], 1
    %239 = vsyncpa [#allocation5], 1

</llo_original>
